<compile_context>
chip_gen: v5e
topology: v5e:2x2
jax: 0.10.0
libtpu: 0.0.40
codegen_flags: <defaults>
</compile_context>

<pallas_src>
import functools

import jax
import jax.numpy as jnp
from jax.experimental import pallas as pl
from jax.experimental.pallas import tpu as pltpu


def _head_kernel(x_ref, w1_ref, b1_ref, w2_ref, b2_ref, o_ref, *, apply_sigmoid):
    # x_ref : [TB, H]  CLS-token rows (activation dtype, f32 or bf16)
    # w1_ref: [H, H]   dense weight, pre-transposed to [in, out] (bf16)
    # b1_ref: [1, H]   dense bias (f32)
    # w2_ref: [1, H]   out_proj weight [out=1, in=H] (bf16)
    # b2_ref: [1, 1]   out_proj bias (f32)
    # o_ref : [1, TB]  lane-dense probabilities / logits
    x = x_ref[...].astype(jnp.bfloat16)

    # Canonical (M,K)x(K,N) matmul on the MXU, f32 accumulation.
    h = jnp.dot(x, w1_ref[...], preferred_element_type=jnp.float32) + b1_ref[...]
    h = jnp.tanh(h)

    # out_proj (H -> 1): VPU multiply + lane reduction instead of an N=1 matmul.
    w2 = w2_ref[...].astype(jnp.float32)                           # [1, H]
    out = jnp.sum(h * w2, axis=-1).reshape(1, -1) + b2_ref[...]    # [1, TB]

    if apply_sigmoid:
        out = 1.0 / (1.0 + jnp.exp(-out))                          # EUP exp + recip

    o_ref[...] = out.astype(o_ref.dtype)


def _pick_batch_tile(B, block_b):
    """Batch tile: one full-array tile for small B (always a legal block);
    otherwise >= 2 lane-aligned (x128) tiles so both v7x TensorCores get work
    and the lane-dense (1, tb) output block stays legal, capped at block_b."""
    if B <= 128:
        return B
    half = ((pl.cdiv(B, 2) + 127) // 128) * 128
    return min(block_b, half)


def roberta_classification_head(features, dense_w, dense_b, out_w, out_b,
                                *, apply_sigmoid=True, block_b=512):
    """features: [B, S, H] encoder output.
    Returns sigmoid(out_proj(tanh(dense(features[:, 0, :])))) as [B, 1]
    (set apply_sigmoid=False to get raw logits)."""
    B, S, H = features.shape
    # RoBERTa hidden sizes (768 / 1024) are lane-aligned; toy sizes must be too.
    assert H % 128 == 0, f"hidden_size must be a multiple of 128, got {H}"
    assert block_b >= 128 and block_b % 128 == 0, block_b

    # Fuse the CLS slice: a row-major reshape is free, and block column 0 of
    # width H in [B, S*H] is exactly features[:, 0, :].
    x_flat = features.reshape(B, S * H)

    # Parameters: bf16 weights, f32 biases.  The dense weight is transposed
    # ONCE here (2 MiB, outside the kernel) to canonical [in, out].
    w1 = dense_w.T.astype(jnp.bfloat16)                  # [H, H]  (in, out)
    b1 = dense_b.reshape(1, H).astype(jnp.float32)       # [1, H]
    w2 = out_w.reshape(1, H).astype(jnp.bfloat16)        # [1, H]  (out=1, in)
    b2 = out_b.reshape(1, 1).astype(jnp.float32)         # [1, 1]

    tb = _pick_batch_tile(B, block_b)
    grid = (pl.cdiv(B, tb),)

    itemsize = jnp.dtype(features.dtype).itemsize
    cost = pl.CostEstimate(
        flops=2 * B * H * (H + 1),
        transcendentals=B * (H + 1),                     # tanh + sigmoid
        bytes_accessed=(B * H * itemsize                 # CLS rows read
                        + H * H * 2 + H * 2              # bf16 weights
                        + H * 4 + 4                      # biases
                        + B * itemsize),                 # output
    )

    kernel = functools.partial(_head_kernel, apply_sigmoid=apply_sigmoid)

    def _param_spec(shape, single_buffer):
        if single_buffer:
            # Constant block index -> fetched once; no double buffer needed.
            return pl.BlockSpec(shape, lambda i: (0, 0),
                                pipeline_mode=pl.Buffered(1))
        return pl.BlockSpec(shape, lambda i: (0, 0))

    def _call(single_buffer_weights):
        return pl.pallas_call(
            kernel,
            out_shape=jax.ShapeDtypeStruct((1, B), features.dtype),
            grid=grid,
            in_specs=[
                pl.BlockSpec((tb, H), lambda i: (i, 0)),          # CLS rows
                _param_spec((H, H), single_buffer_weights),       # dense W^T
                _param_spec((1, H), single_buffer_weights),       # dense bias
                _param_spec((1, H), single_buffer_weights),       # out_proj W
                _param_spec((1, 1), single_buffer_weights),       # out_proj b
            ],
            out_specs=pl.BlockSpec((1, tb), lambda i: (0, i)),    # lane-dense
            compiler_params=pltpu.CompilerParams(
                dimension_semantics=("parallel",),
                vmem_limit_bytes=48 * 1024 * 1024),
            cost_estimate=cost,
        )(x_flat, w1, b1, w2, b2)

    try:
        out = _call(True)
    except Exception:
        # pipeline_mode=pl.Buffered(1) unsupported on this jax/libtpu build;
        # fall back to default double-buffered parameter blocks (~2 MiB extra).
        out = _call(False)

    # (1, B) lane-dense -> (B, 1) column, matching the PyTorch output layout.
    return out.reshape(B, 1)


def _reference(features, dense_w, dense_b, out_w, out_b, apply_sigmoid=True):
    # Mirrors the kernel's bf16 rounding of activations/weights, f32 accumulate.
    x = features[:, 0, :].astype(jnp.bfloat16).astype(jnp.float32)
    w1 = dense_w.astype(jnp.bfloat16).astype(jnp.float32)
    w2 = out_w.astype(jnp.bfloat16).astype(jnp.float32)
    h = jnp.tanh(x @ w1.T + dense_b.reshape(1, -1))
    logits = h @ w2.T + out_b.reshape(1, 1)
    return jax.nn.sigmoid(logits) if apply_sigmoid else logits


if __name__ == "__main__":
    key = jax.random.PRNGKey(0)
    k_feat, k_w1, k_b1, k_w2, k_b2, k_feat2 = jax.random.split(key, 6)

    # Deterministic synthetic parameters (PyTorch layout: weight = [out, in]).
    H = 128   # hidden (lane-aligned; real RoBERTa uses 768/1024)
    dense_w = jax.random.normal(k_w1, (H, H), dtype=jnp.float32) * 0.05
    dense_b = jax.random.normal(k_b1, (H,), dtype=jnp.float32) * 0.05
    out_w = jax.random.normal(k_w2, (1, H), dtype=jnp.float32) * 0.05
    out_b = jax.random.normal(k_b2, (1,), dtype=jnp.float32) * 0.05

    # --- small canonical case (single grid step, full-array tile) ----------
    B, S = 2, 8
    features = jax.random.normal(k_feat, (B, S, H), dtype=jnp.float32)
    prob = roberta_classification_head(features, dense_w, dense_b, out_w, out_b)
    prob = jax.block_until_ready(prob)
    ref = _reference(features, dense_w, dense_b, out_w, out_b)
    assert prob.shape == (B, 1), prob.shape
    assert bool(jnp.all((prob >= 0.0) & (prob <= 1.0)))
    assert jnp.allclose(prob, ref, atol=2e-3, rtol=2e-2), (prob, ref)

    # --- ragged multi-tile case (grid of 2, partial last batch tile) -------
    B2 = 200
    features2 = jax.random.normal(k_feat2, (B2, S, H), dtype=jnp.float32)
    prob2 = roberta_classification_head(features2, dense_w, dense_b, out_w, out_b)
    prob2 = jax.block_until_ready(prob2)
    ref2 = _reference(features2, dense_w, dense_b, out_w, out_b)
    assert prob2.shape == (B2, 1), prob2.shape
    assert jnp.allclose(prob2, ref2, atol=2e-3, rtol=2e-2)

    print("KERNEL_OK")
</pallas_src>

<mosaic_0001>
module attributes {stable_mosaic.version = 11 : i64} {
  func.func @_head_kernel(%arg0: i32, %arg1: memref<2x128xf32, #tpu.memory_space<vmem>>, %arg2: memref<128x128xbf16, #tpu.memory_space<vmem>>, %arg3: memref<1x128xf32, #tpu.memory_space<vmem>>, %arg4: memref<1x128xbf16, #tpu.memory_space<vmem>>, %arg5: memref<1x1xf32, #tpu.memory_space<vmem>>, %arg6: memref<1x2xf32, #tpu.memory_space<vmem>>) attributes {dimension_semantics = [#tpu.dimension_semantics<parallel>], iteration_bounds = array<i64: 1>, scalar_prefetch = 0 : i64, scratch_operands = 0 : i64, tpu.core_type = #tpu.core_type<tc>, window_params = [{transform_indices = @transform_0, window_bounds = array<i64: 2, 128>}, {pipeline_mode = #tpu.pipeline_mode<synchronous>, transform_indices = @transform_1, window_bounds = array<i64: 128, 128>}, {pipeline_mode = #tpu.pipeline_mode<synchronous>, transform_indices = @transform_2, window_bounds = array<i64: 1, 128>}, {pipeline_mode = #tpu.pipeline_mode<synchronous>, transform_indices = @transform_3, window_bounds = array<i64: 1, 128>}, {pipeline_mode = #tpu.pipeline_mode<synchronous>, transform_indices = @transform_4, window_bounds = array<i64: 1, 1>}, {transform_indices = @transform_5, window_bounds = array<i64: 1, 2>}]} {
    %c0 = arith.constant 0 : index
    %c0_0 = arith.constant 0 : index
    %0 = vector.load %arg1[%c0, %c0_0] : memref<2x128xf32, #tpu.memory_space<vmem>>, vector<2x128xf32>
    %1 = arith.truncf %0 : vector<2x128xf32> to vector<2x128xbf16>
    %c0_1 = arith.constant 0 : index
    %c0_2 = arith.constant 0 : index
    %2 = vector.load %arg2[%c0_1, %c0_2] : memref<128x128xbf16, #tpu.memory_space<vmem>>, vector<128x128xbf16>
    %cst = arith.constant dense<0.000000e+00> : vector<2x128xf32>
    %3 = tpu.matmul %1, %2, %cst {dimension_numbers = #tpu.dot_dimension_numbers<[1], [0], [0], [1], [0, 0, 1, 1], [], []>} : vector<2x128xbf16>, vector<128x128xbf16>, vector<2x128xf32> -> vector<2x128xf32>
    %c0_3 = arith.constant 0 : index
    %c0_4 = arith.constant 0 : index
    %4 = vector.load %arg3[%c0_3, %c0_4] : memref<1x128xf32, #tpu.memory_space<vmem>>, vector<1x128xf32>
    %5 = vector.broadcast %4 : vector<1x128xf32> to vector<2x128xf32>
    %6 = arith.addf %3, %5 : vector<2x128xf32>
    %7 = math.tanh %6 : vector<2x128xf32>
    %c0_5 = arith.constant 0 : index
    %c0_6 = arith.constant 0 : index
    %8 = vector.load %arg4[%c0_5, %c0_6] : memref<1x128xbf16, #tpu.memory_space<vmem>>, vector<1x128xbf16>
    %9 = arith.extf %8 : vector<1x128xbf16> to vector<1x128xf32>
    %10 = vector.broadcast %9 : vector<1x128xf32> to vector<2x128xf32>
    %11 = arith.mulf %7, %10 : vector<2x128xf32>
    %cst_7 = arith.constant dense<0.000000e+00> : vector<2xf32>
    %12 = vector.multi_reduction <add>, %11, %cst_7 [1] : vector<2x128xf32> to vector<2xf32>
    %13 = vector.shape_cast %12 : vector<2xf32> to vector<1x2xf32>
    %c0_8 = arith.constant 0 : index
    %c0_9 = arith.constant 0 : index
    %14 = vector.load %arg5[%c0_8, %c0_9] : memref<1x1xf32, #tpu.memory_space<vmem>>, vector<1x1xf32>
    %15 = vector.broadcast %14 : vector<1x1xf32> to vector<1x2xf32>
    %16 = arith.addf %13, %15 : vector<1x2xf32>
    %cst_10 = arith.constant 0.000000e+00 : f32
    %17 = vector.broadcast %cst_10 : f32 to vector<1x2xf32>
    %18 = arith.subf %17, %16 : vector<1x2xf32>
    %19 = math.exp %18 : vector<1x2xf32>
    %cst_11 = arith.constant 1.000000e+00 : f32
    %20 = vector.broadcast %cst_11 : f32 to vector<1x2xf32>
    %21 = arith.addf %20, %19 : vector<1x2xf32>
    %cst_12 = arith.constant 1.000000e+00 : f32
    %22 = vector.broadcast %cst_12 : f32 to vector<1x2xf32>
    %23 = arith.divf %22, %21 : vector<1x2xf32>
    %c0_13 = arith.constant 0 : index
    %c0_14 = arith.constant 0 : index
    %24 = vector.load %arg6[%c0_13, %c0_14] : memref<1x2xf32, #tpu.memory_space<vmem>>, vector<1x2xf32>
    tpu.vector_store %arg6[%c0_13, %c0_14], %23 {strides = array<i32>} : memref<1x2xf32, #tpu.memory_space<vmem>>, vector<1x2xf32>,
    return
  }
  func.func @transform_0(%arg0: i32) -> (i32, i32) {
    %c0_i32 = arith.constant 0 : i32
    %c0_i32_0 = arith.constant 0 : i32
    return %arg0, %c0_i32 : i32, i32
  }
  func.func @transform_1(%arg0: i32) -> (i32, i32) {
    %c0_i32 = arith.constant 0 : i32
    %c0_i32_0 = arith.constant 0 : i32
    %c0_i32_1 = arith.constant 0 : i32
    return %c0_i32, %c0_i32_0 : i32, i32
  }
  func.func @transform_2(%arg0: i32) -> (i32, i32) {
    %c0_i32 = arith.constant 0 : i32
    %c0_i32_0 = arith.constant 0 : i32
    %c0_i32_1 = arith.constant 0 : i32
    return %c0_i32, %c0_i32_0 : i32, i32
  }
  func.func @transform_3(%arg0: i32) -> (i32, i32) {
    %c0_i32 = arith.constant 0 : i32
    %c0_i32_0 = arith.constant 0 : i32
    %c0_i32_1 = arith.constant 0 : i32
    return %c0_i32, %c0_i32_0 : i32, i32
  }
  func.func @transform_4(%arg0: i32) -> (i32, i32) {
    %c0_i32 = arith.constant 0 : i32
    %c0_i32_0 = arith.constant 0 : i32
    %c0_i32_1 = arith.constant 0 : i32
    return %c0_i32, %c0_i32_0 : i32, i32
  }
  func.func @transform_5(%arg0: i32) -> (i32, i32) {
    %c0_i32 = arith.constant 0 : i32
    %c0_i32_0 = arith.constant 0 : i32
    return %c0_i32, %arg0 : i32, i32
  }
}

module attributes {stable_mosaic.version = 11 : i64} {
  func.func @_head_kernel(%arg0: i32, %arg1: memref<2x128xf32, #tpu.memory_space<vmem>>, %arg2: memref<128x128xbf16, #tpu.memory_space<vmem>>, %arg3: memref<1x128xf32, #tpu.memory_space<vmem>>, %arg4: memref<1x128xbf16, #tpu.memory_space<vmem>>, %arg5: memref<1x1xf32, #tpu.memory_space<vmem>>, %arg6: memref<1x2xf32, #tpu.memory_space<vmem>>) attributes {dimension_semantics = [#tpu.dimension_semantics<parallel>], iteration_bounds = array<i64: 1>, scalar_prefetch = 0 : i64, scratch_operands = 0 : i64, tpu.core_type = #tpu.core_type<tc>, window_params = [{transform_indices = @transform_0, window_bounds = array<i64: 2, 128>}, {pipeline_mode = #tpu.pipeline_mode<synchronous>, transform_indices = @transform_1, window_bounds = array<i64: 128, 128>}, {pipeline_mode = #tpu.pipeline_mode<synchronous>, transform_indices = @transform_2, window_bounds = array<i64: 1, 128>}, {pipeline_mode = #tpu.pipeline_mode<synchronous>, transform_indices = @transform_3, window_bounds = array<i64: 1, 128>}, {pipeline_mode = #tpu.pipeline_mode<synchronous>, transform_indices = @transform_4, window_bounds = array<i64: 1, 1>}, {transform_indices = @transform_5, window_bounds = array<i64: 1, 2>}]} {
    %c0 = arith.constant 0 : index
    %c0_0 = arith.constant 0 : index
    %0 = vector.load %arg1[%c0, %c0_0] : memref<2x128xf32, #tpu.memory_space<vmem>>, vector<2x128xf32>
    %1 = arith.truncf %0 : vector<2x128xf32> to vector<2x128xbf16>
    %c0_1 = arith.constant 0 : index
    %c0_2 = arith.constant 0 : index
    %2 = vector.load %arg2[%c0_1, %c0_2] : memref<128x128xbf16, #tpu.memory_space<vmem>>, vector<128x128xbf16>
    %cst = arith.constant dense<0.000000e+00> : vector<2x128xf32>
    %3 = tpu.matmul %1, %2, %cst {dimension_numbers = #tpu.dot_dimension_numbers<[1], [0], [0], [1], [0, 0, 1, 1], [], []>} : vector<2x128xbf16>, vector<128x128xbf16>, vector<2x128xf32> -> vector<2x128xf32>
    %c0_3 = arith.constant 0 : index
    %c0_4 = arith.constant 0 : index
    %4 = vector.load %arg3[%c0_3, %c0_4] : memref<1x128xf32, #tpu.memory_space<vmem>>, vector<1x128xf32>
    %5 = vector.broadcast %4 : vector<1x128xf32> to vector<2x128xf32>
    %6 = arith.addf %3, %5 : vector<2x128xf32>
    %7 = math.tanh %6 : vector<2x128xf32>
    %c0_5 = arith.constant 0 : index
    %c0_6 = arith.constant 0 : index
    %8 = vector.load %arg4[%c0_5, %c0_6] : memref<1x128xbf16, #tpu.memory_space<vmem>>, vector<1x128xbf16>
    %9 = arith.extf %8 : vector<1x128xbf16> to vector<1x128xf32>
    %10 = vector.broadcast %9 : vector<1x128xf32> to vector<2x128xf32>
    %11 = arith.mulf %7, %10 : vector<2x128xf32>
    %cst_7 = arith.constant dense<0.000000e+00> : vector<2xf32>
    %12 = vector.multi_reduction <add>, %11, %cst_7 [1] : vector<2x128xf32> to vector<2xf32>
    %13 = vector.shape_cast %12 : vector<2xf32> to vector<1x2xf32>
    %c0_8 = arith.constant 0 : index
    %c0_9 = arith.constant 0 : index
    %14 = vector.load %arg5[%c0_8, %c0_9] : memref<1x1xf32, #tpu.memory_space<vmem>>, vector<1x1xf32>
    %15 = vector.broadcast %14 : vector<1x1xf32> to vector<1x2xf32>
    %16 = arith.addf %13, %15 : vector<1x2xf32>
    %cst_10 = arith.constant 0.000000e+00 : f32
    %17 = vector.broadcast %cst_10 : f32 to vector<1x2xf32>
    %18 = arith.subf %17, %16 : vector<1x2xf32>
    %19 = math.exp %18 : vector<1x2xf32>
    %cst_11 = arith.constant 1.000000e+00 : f32
    %20 = vector.broadcast %cst_11 : f32 to vector<1x2xf32>
    %21 = arith.addf %20, %19 : vector<1x2xf32>
    %cst_12 = arith.constant 1.000000e+00 : f32
    %22 = vector.broadcast %cst_12 : f32 to vector<1x2xf32>
    %23 = arith.divf %22, %21 : vector<1x2xf32>
    %c0_13 = arith.constant 0 : index
    %c0_14 = arith.constant 0 : index
    %24 = vector.load %arg6[%c0_13, %c0_14] : memref<1x2xf32, #tpu.memory_space<vmem>>, vector<1x2xf32>
    tpu.vector_store %arg6[%c0_13, %c0_14], %23 {strides = array<i32>} : memref<1x2xf32, #tpu.memory_space<vmem>>, vector<1x2xf32>,
    return
  }
  func.func @transform_0(%arg0: i32) -> (i32, i32) {
    %c0_i32 = arith.constant 0 : i32
    %c0_i32_0 = arith.constant 0 : i32
    return %arg0, %c0_i32 : i32, i32
  }
  func.func @transform_1(%arg0: i32) -> (i32, i32) {
    %c0_i32 = arith.constant 0 : i32
    %c0_i32_0 = arith.constant 0 : i32
    %c0_i32_1 = arith.constant 0 : i32
    return %c0_i32, %c0_i32_0 : i32, i32
  }
  func.func @transform_2(%arg0: i32) -> (i32, i32) {
    %c0_i32 = arith.constant 0 : i32
    %c0_i32_0 = arith.constant 0 : i32
    %c0_i32_1 = arith.constant 0 : i32
    return %c0_i32, %c0_i32_0 : i32, i32
  }
  func.func @transform_3(%arg0: i32) -> (i32, i32) {
    %c0_i32 = arith.constant 0 : i32
    %c0_i32_0 = arith.constant 0 : i32
    %c0_i32_1 = arith.constant 0 : i32
    return %c0_i32, %c0_i32_0 : i32, i32
  }
  func.func @transform_4(%arg0: i32) -> (i32, i32) {
    %c0_i32 = arith.constant 0 : i32
    %c0_i32_0 = arith.constant 0 : i32
    %c0_i32_1 = arith.constant 0 : i32
    return %c0_i32, %c0_i32_0 : i32, i32
  }
  func.func @transform_5(%arg0: i32) -> (i32, i32) {
    %c0_i32 = arith.constant 0 : i32
    %c0_i32_0 = arith.constant 0 : i32
    return %c0_i32, %arg0 : i32, i32
  }
}

</mosaic_0001>

<llo_original>
// kernel: tpu_custom_call.1
$region0: #{tpu_custom_call.1}
  #allocation0 [shape = 'u32[]', space=smem, size = 0x4, offset = 0x4, fixed_abs, tag = 'smem constant byte address 0x4 - core index']
  #allocation1 [shape = 'u32[72,128]{1,0:T(1,128)}', space=vmem, size = 0x9000, scoped, tag = 'internal scratch']
  #allocation2 [shape = 'f32[1,1]{1,0:T(1,128)S(1)}', space=vmem, size = 0x200, scoped, tag = 'scoped memory for tpu_custom_call.1']
  %s0 = inlined_call_operand.hbm [shape: f32[2,1024], index: 0, kind: input, shape index: {}]
  %s1 = inlined_call_operand.hbm [shape: bf16[128,128], index: 1, kind: input, shape index: {}]
  %s2 = inlined_call_operand.vmem [shape: f32[1,128], index: 2, kind: input, shape index: {}]
  %s3 = inlined_call_operand.vmem [shape: bf16[1,128], index: 3, kind: input, shape index: {}]
  %s4 = inlined_call_operand.<no memory space> [shape: f32[1,1], index: 4, kind: input, shape index: {}]
  %s5 = inlined_call_operand.hbm [shape: f32[1,2], index: 5, kind: output, shape index: {}]
  %s6 = sld [smem:[#allocation0]]
  $region38: #{tpu_custom_call.1} parent=0
    _
  %s8 = ssub.s32 1, %s6
  %s9 = scalar_select 0, %s8, %s6
  %v10 = vstv %s4
  %11 = vst [vmem:[#allocation2] sm:$0x1] %v10
  $region1: #{tpu_custom_call.1} parent=0
    #allocation3 [shape = 'u8[1024]{0}', space=vmem, size = 0x400, scoped, tag = 'input window, operand 0, single buffered']
    #allocation4 [shape = 's32[1]{0}', space=sflag, size = 0x4, scoped, tag = 'scoped memory for tpu_custom_call.1']
    #allocation5 [shape = 's32[1]{0}', space=sflag, size = 0x4, scoped, tag = 'scoped memory for tpu_custom_call.1']
    #allocation6 [shape = 'u8[32768]{0}', space=vmem, size = 0x8000, scoped, tag = 'input window, operand 1, single buffered']
    #allocation7 [shape = 's32[1]{0}', space=sflag, size = 0x4, scoped, tag = 'scoped memory for tpu_custom_call.1']
    #allocation8 [shape = 'u8[512]{0}', space=vmem, size = 0x400, scoped, tag = 'output window, operand 0, single buffered']
    %12 = vsyncpa [#allocation4], 0
    %13 = vsyncpa [#allocation7], 0
    %14 = vsyncpa [#allocation5], 0
    // Predicated region
    $region2: #{tpu_custom_call.1} parent=1 // pred_check
      _
    $region3: #{tpu_custom_call.1} parent=1 // pred_check_branch
      %16 = sbr.rel (0) target = $region5
    $region4: #{tpu_custom_call.1} parent=1 // pred_region
      %18 = vsyncadd [#allocation4], 0
      %s20 = sshll.u32 %s0, 4
      %s21 = int_to_ptr.hbm [resolvable:$true] %s20
      %s22 = sshll.u32 [#allocation3], 4
      %s23 = int_to_ptr.vmem [resolvable:$true] %s22
      %25 = dma.hbm_to_vmem [thread:$0]  %s21, 32, %s23, [#allocation4]
    $region5: #{tpu_custom_call.1} parent=1 // pred_fallthru
      _
    // Predicated region
    $region6: #{tpu_custom_call.1} parent=1 // pred_check
      _
    $region7: #{tpu_custom_call.1} parent=1 // pred_check_branch
      %27 = sbr.rel (0) target = $region9
    $region8: #{tpu_custom_call.1} parent=1 // pred_region
      %29 = vsyncadd [#allocation7], 0
      %s30 = sshll.u32 %s1, 4
      %s31 = int_to_ptr.hbm [resolvable:$true] %s30
      %s32 = sshll.u32 [#allocation6], 4
      %s33 = int_to_ptr.vmem [resolvable:$true] %s32
      %38 = dma.hbm_to_vmem [thread:$0]  %s31, 1024, %s33, [#allocation7], 64, 64, 4
    $region9: #{tpu_custom_call.1} parent=1 // pred_fallthru
      _
    // Predicated region
    $region10: #{tpu_custom_call.1} parent=1 // pred_check
      _
    $region11: #{tpu_custom_call.1} parent=1 // pred_check_branch
      %40 = sbr.rel (0) target = $region13
    $region12: #{tpu_custom_call.1} parent=1 // pred_region
      _
    $region13: #{tpu_custom_call.1} parent=1 // pred_fallthru
      _
    // Predicated region
    $region14: #{tpu_custom_call.1} parent=1 // pred_check
      _
    $region15: #{tpu_custom_call.1} parent=1 // pred_check_branch
      %42 = sbr.rel (0) target = $region17
    $region16: #{tpu_custom_call.1} parent=1 // pred_region
      _
    $region17: #{tpu_custom_call.1} parent=1 // pred_fallthru
      _
    // Predicated region
    $region18: #{tpu_custom_call.1} parent=1 // pred_check
      _
    $region19: #{tpu_custom_call.1} parent=1 // pred_check_branch
      %44 = sbr.rel (0) target = $region21
    $region20: #{tpu_custom_call.1} parent=1 // pred_region
      _
    $region21: #{tpu_custom_call.1} parent=1 // pred_fallthru
      _
    // Predicated region
    $region22: #{tpu_custom_call.1} parent=1 // pred_check
      _
    $region23: #{tpu_custom_call.1} parent=1 // pred_check_branch
      %46 = sbr.rel (0) target = $region25
    $region24: #{tpu_custom_call.1} parent=1 // pred_region
      %48 = dma.done [#allocation4], 32
    $region25: #{tpu_custom_call.1} parent=1 // pred_fallthru
      _
    // Predicated region
    $region26: #{tpu_custom_call.1} parent=1 // pred_check
      _
    $region27: #{tpu_custom_call.1} parent=1 // pred_check_branch
      %50 = sbr.rel (0) target = $region29
    $region28: #{tpu_custom_call.1} parent=1 // pred_region
      %52 = dma.done [#allocation7], 1024
    $region29: #{tpu_custom_call.1} parent=1 // pred_fallthru
      _
    %v53 = vld [vmem:[#allocation3] sm:$0x3]
    %v54 = vpack.c.bf16 %v53, %v53
    %v55 = vld [vmem:[#allocation6] sm:$0xf]
    %v56 = vld [vmem:[#allocation6 + $0x4] sm:$0xf]
    %v57 = vld [vmem:[#allocation6 + $0x8] sm:$0xf]
    %v58 = vld [vmem:[#allocation6 + $0xc] sm:$0xf]
    %v59 = vld [vmem:[#allocation6 + $0x10] sm:$0xf]
    %v60 = vld [vmem:[#allocation6 + $0x14] sm:$0xf]
    %v61 = vld [vmem:[#allocation6 + $0x18] sm:$0xf]
    %v62 = vld [vmem:[#allocation6 + $0x1c] sm:$0xf]
    %v63 = vld [vmem:[#allocation6 + $0x20] sm:$0xf]
    %v64 = vld [vmem:[#allocation6 + $0x24] sm:$0xf]
    %v65 = vld [vmem:[#allocation6 + $0x28] sm:$0xf]
    %v66 = vld [vmem:[#allocation6 + $0x2c] sm:$0xf]
    %v67 = vld [vmem:[#allocation6 + $0x30] sm:$0xf]
    %v68 = vld [vmem:[#allocation6 + $0x34] sm:$0xf]
    %v69 = vld [vmem:[#allocation6 + $0x38] sm:$0xf]
    %v70 = vld [vmem:[#allocation6 + $0x3c] sm:$0xf]
    %v71 = vld [vmem:[%s2] sm:$0x1]
    %v73 = vperm.slane %v71, 0
    %v91 = vunpack.c.l.b16 %v55
    %v92 = vunpack.c.l.b16 %v56
    %v93 = vunpack.c.l.b16 %v57
    %v94 = vunpack.c.l.b16 %v58
    %v95 = vunpack.c.l.b16 %v59
    %v96 = vunpack.c.l.b16 %v60
    %v97 = vunpack.c.l.b16 %v61
    %v98 = vunpack.c.l.b16 %v62
    %v99 = vunpack.c.l.b16 %v63
    %v100 = vunpack.c.l.b16 %v64
    %v101 = vunpack.c.l.b16 %v65
    %v102 = vunpack.c.l.b16 %v66
    %v103 = vunpack.c.l.b16 %v67
    %v104 = vunpack.c.l.b16 %v68
    %v105 = vunpack.c.l.b16 %v69
    %v106 = vunpack.c.l.b16 %v70
    %v107 = vpack.c.b16 %v92, %v91
    %v108 = vpack.c.b16 %v94, %v93
    %v109 = vpack.c.b16 %v96, %v95
    %v110 = vpack.c.b16 %v98, %v97
    %v111 = vpack.c.b16 %v100, %v99
    %v112 = vpack.c.b16 %v102, %v101
    %v113 = vpack.c.b16 %v104, %v103
    %v114 = vpack.c.b16 %v106, %v105
    %123 = vmatpush.bf16.msra.mxu0 %v114
    %124 = vmatpush.bf16.msra.mxu0 %v113
    %125 = vmatpush.bf16.msra.mxu0 %v112
    %126 = vmatpush.bf16.msra.mxu0 %v111
    %127 = vmatpush.bf16.msra.mxu0 %v110
    %128 = vmatpush.bf16.msra.mxu0 %v109
    %129 = vmatpush.bf16.msra.mxu0 %v108
    %130 = vmatpush.bf16.msra.mxu0 %v107
    %131 = vmatmul.bf16.gmra.mxu0 %v54
    %v132 = vpop.f32.mrf.mxu0
    %v133 = vadd.f32 %v73, %v132
    %v134 = vpop.f32.mrf.mxu0
    %135 = vdwg.mxu0
    %v136 = vtanh.pop %v133
    %v137 = vld [vmem:[%s3] sm:$0x1]
    %v138 = vunpack.c.l.bf16 %v137
    %v139 = vperm.slane %v138, 0
    %v140 = vmul.f32 %v136, %v139
    %vm141 = vcmask 1041408
    %v142 = vsel %vm141, %v140, 0.0
    %143 = vadd.xlane.f32.xlu0 %v142
    %v144 = vpop.xlane.xlu0 %143
    %v145 = vld [vmem:[#allocation2] sm:$0x1]
    %147 = vset.pattern.permute.xlu0 0
    %148 = vperm.xlu0 %147, %v145
    %v149 = vpop.permute.xlu0 %148
    %v151 = vperm.slane %v149, 0
    %v152 = vadd.f32 %v144, %v151
    %v153 = vsub.f32 0.0, %v152
    %v154 = vmul.f32 %v153, 1.442695
    %v155 = vpow.pop %v154
    %v156 = vadd.f32 %v155, 1.0
    %v157 = vrcp.pop %v156
    %v158 = vmul.f32 %v156, %v157
    %v159 = vsub.f32 1.0, %v158
    %v160 = vmul.f32 %v157, %v159
    %v161 = vadd.f32 %v157, %v160
    %vm162 = vweird.f32 %v156
    %vm163 = vweird.f32 %v157
    %vm164 = vmor %vm162, %vm163
    %v165 = vsel %vm164, %v157, %v161
    %v166 = vand.u32 2147483647, %v156
    %vm167 = vcmp.eq.f32.partialorder %v166, 8.507059e+37
    %v168 = vand.u32 %v156, 2147483648
    %v169 = vor.u32 1.1754944e-38, %v168
    %v170 = vsel %vm167, %v169, %v165
    %v171 = vmul.f32 1.0, %v170
    %v173 = vlaneseq
    %v174 = vand.u32 %v173, 127
    %v175 = vperm.slane %v171, %v174
    %vm177 = vcmask 8192
    %178 = vst.msk [vmem:[#allocation8] sm:$0x1] %vm177, %v175
    // Predicated region
    $region30: #{tpu_custom_call.1} parent=1 // pred_check
      _
    $region31: #{tpu_custom_call.1} parent=1 // pred_check_branch
      %180 = sbr.rel (0) target = $region33
    $region32: #{tpu_custom_call.1} parent=1 // pred_region
      %182 = vsyncadd [#allocation5], 0
      %s184 = sshll.u32 [#allocation8], 4
      %s185 = int_to_ptr.vmem [resolvable:$true] %s184
      %s186 = sshll.u32 %s5, 4
      %s187 = int_to_ptr.hbm [resolvable:$true] %s186
      %189 = dma.vmem_to_hbm [thread:$0]  %s185, 16, %s187, [#allocation5]
    $region33: #{tpu_custom_call.1} parent=1 // pred_fallthru
      _
    // Predicated region
    $region34: #{tpu_custom_call.1} parent=1 // pred_check
      _
    $region35: #{tpu_custom_call.1} parent=1 // pred_check_branch
      %191 = sbr.rel (0) target = $region37
    $region36: #{tpu_custom_call.1} parent=1 // pred_region
      %193 = dma.done [#allocation5], 16
    $region37: #{tpu_custom_call.1} parent=1 // pred_fallthru
      _
    %194 = vsyncpa [#allocation4], 1
    %195 = vsyncpa [#allocation7], 1
    %196 = vsyncpa [#allocation5], 1

// kernel: tpu_custom_call.1
$region0: #{tpu_custom_call.1}
  #allocation0 [shape = 'u32[]', space=smem, size = 0x4, offset = 0x4, fixed_abs, tag = 'smem constant byte address 0x4 - core index']
  #allocation1 [shape = 'u32[72,128]{1,0:T(1,128)}', space=vmem, size = 0x9000, scoped, tag = 'internal scratch']
  #allocation2 [shape = 'f32[1,1]{1,0:T(1,128)S(1)}', space=vmem, size = 0x200, scoped, tag = 'scoped memory for tpu_custom_call.1']
  %s0 = inlined_call_operand.hbm [shape: f32[2,1024], index: 0, kind: input, shape index: {}]
  %s1 = inlined_call_operand.hbm [shape: bf16[128,128], index: 1, kind: input, shape index: {}]
  %s2 = inlined_call_operand.vmem [shape: f32[1,128], index: 2, kind: input, shape index: {}]
  %s3 = inlined_call_operand.vmem [shape: bf16[1,128], index: 3, kind: input, shape index: {}]
  %s4 = inlined_call_operand.<no memory space> [shape: f32[1,1], index: 4, kind: input, shape index: {}]
  %s5 = inlined_call_operand.hbm [shape: f32[1,2], index: 5, kind: output, shape index: {}]
  %s6 = sld [smem:[#allocation0]]
  $region38: #{tpu_custom_call.1} parent=0
    _
  %s8 = ssub.s32 1, %s6
  %s9 = scalar_select 0, %s8, %s6
  %v10 = vstv %s4
  %11 = vst [vmem:[#allocation2] sm:$0x1] %v10
  $region1: #{tpu_custom_call.1} parent=0
    #allocation3 [shape = 'u8[1024]{0}', space=vmem, size = 0x400, scoped, tag = 'input window, operand 0, single buffered']
    #allocation4 [shape = 's32[1]{0}', space=sflag, size = 0x4, scoped, tag = 'scoped memory for tpu_custom_call.1']
    #allocation5 [shape = 's32[1]{0}', space=sflag, size = 0x4, scoped, tag = 'scoped memory for tpu_custom_call.1']
    #allocation6 [shape = 'u8[32768]{0}', space=vmem, size = 0x8000, scoped, tag = 'input window, operand 1, single buffered']
    #allocation7 [shape = 's32[1]{0}', space=sflag, size = 0x4, scoped, tag = 'scoped memory for tpu_custom_call.1']
    #allocation8 [shape = 'u8[512]{0}', space=vmem, size = 0x400, scoped, tag = 'output window, operand 0, single buffered']
    %12 = vsyncpa [#allocation4], 0
    %13 = vsyncpa [#allocation7], 0
    %14 = vsyncpa [#allocation5], 0
    // Predicated region
    $region2: #{tpu_custom_call.1} parent=1 // pred_check
      _
    $region3: #{tpu_custom_call.1} parent=1 // pred_check_branch
      %16 = sbr.rel (0) target = $region5
    $region4: #{tpu_custom_call.1} parent=1 // pred_region
      %18 = vsyncadd [#allocation4], 0
      %s20 = sshll.u32 %s0, 4
      %s21 = int_to_ptr.hbm [resolvable:$true] %s20
      %s22 = sshll.u32 [#allocation3], 4
      %s23 = int_to_ptr.vmem [resolvable:$true] %s22
      %25 = dma.hbm_to_vmem [thread:$0]  %s21, 32, %s23, [#allocation4]
    $region5: #{tpu_custom_call.1} parent=1 // pred_fallthru
      _
    // Predicated region
    $region6: #{tpu_custom_call.1} parent=1 // pred_check
      _
    $region7: #{tpu_custom_call.1} parent=1 // pred_check_branch
      %27 = sbr.rel (0) target = $region9
    $region8: #{tpu_custom_call.1} parent=1 // pred_region
      %29 = vsyncadd [#allocation7], 0
      %s30 = sshll.u32 %s1, 4
      %s31 = int_to_ptr.hbm [resolvable:$true] %s30
      %s32 = sshll.u32 [#allocation6], 4
      %s33 = int_to_ptr.vmem [resolvable:$true] %s32
      %38 = dma.hbm_to_vmem [thread:$0]  %s31, 1024, %s33, [#allocation7], 64, 64, 4
    $region9: #{tpu_custom_call.1} parent=1 // pred_fallthru
      _
    // Predicated region
    $region10: #{tpu_custom_call.1} parent=1 // pred_check
      _
    $region11: #{tpu_custom_call.1} parent=1 // pred_check_branch
      %40 = sbr.rel (0) target = $region13
    $region12: #{tpu_custom_call.1} parent=1 // pred_region
      _
    $region13: #{tpu_custom_call.1} parent=1 // pred_fallthru
      _
    // Predicated region
    $region14: #{tpu_custom_call.1} parent=1 // pred_check
      _
    $region15: #{tpu_custom_call.1} parent=1 // pred_check_branch
      %42 = sbr.rel (0) target = $region17
    $region16: #{tpu_custom_call.1} parent=1 // pred_region
      _
    $region17: #{tpu_custom_call.1} parent=1 // pred_fallthru
      _
    // Predicated region
    $region18: #{tpu_custom_call.1} parent=1 // pred_check
      _
    $region19: #{tpu_custom_call.1} parent=1 // pred_check_branch
      %44 = sbr.rel (0) target = $region21
    $region20: #{tpu_custom_call.1} parent=1 // pred_region
      _
    $region21: #{tpu_custom_call.1} parent=1 // pred_fallthru
      _
    // Predicated region
    $region22: #{tpu_custom_call.1} parent=1 // pred_check
      _
    $region23: #{tpu_custom_call.1} parent=1 // pred_check_branch
      %46 = sbr.rel (0) target = $region25
    $region24: #{tpu_custom_call.1} parent=1 // pred_region
      %48 = dma.done [#allocation4], 32
    $region25: #{tpu_custom_call.1} parent=1 // pred_fallthru
      _
    // Predicated region
    $region26: #{tpu_custom_call.1} parent=1 // pred_check
      _
    $region27: #{tpu_custom_call.1} parent=1 // pred_check_branch
      %50 = sbr.rel (0) target = $region29
    $region28: #{tpu_custom_call.1} parent=1 // pred_region
      %52 = dma.done [#allocation7], 1024
    $region29: #{tpu_custom_call.1} parent=1 // pred_fallthru
      _
    %v53 = vld [vmem:[#allocation3] sm:$0x3]
    %v54 = vpack.c.bf16 %v53, %v53
    %v55 = vld [vmem:[#allocation6] sm:$0xf]
    %v56 = vld [vmem:[#allocation6 + $0x4] sm:$0xf]
    %v57 = vld [vmem:[#allocation6 + $0x8] sm:$0xf]
    %v58 = vld [vmem:[#allocation6 + $0xc] sm:$0xf]
    %v59 = vld [vmem:[#allocation6 + $0x10] sm:$0xf]
    %v60 = vld [vmem:[#allocation6 + $0x14] sm:$0xf]
    %v61 = vld [vmem:[#allocation6 + $0x18] sm:$0xf]
    %v62 = vld [vmem:[#allocation6 + $0x1c] sm:$0xf]
    %v63 = vld [vmem:[#allocation6 + $0x20] sm:$0xf]
    %v64 = vld [vmem:[#allocation6 + $0x24] sm:$0xf]
    %v65 = vld [vmem:[#allocation6 + $0x28] sm:$0xf]
    %v66 = vld [vmem:[#allocation6 + $0x2c] sm:$0xf]
    %v67 = vld [vmem:[#allocation6 + $0x30] sm:$0xf]
    %v68 = vld [vmem:[#allocation6 + $0x34] sm:$0xf]
    %v69 = vld [vmem:[#allocation6 + $0x38] sm:$0xf]
    %v70 = vld [vmem:[#allocation6 + $0x3c] sm:$0xf]
    %v71 = vld [vmem:[%s2] sm:$0x1]
    %v73 = vperm.slane %v71, 0
    %v91 = vunpack.c.l.b16 %v55
    %v92 = vunpack.c.l.b16 %v56
    %v93 = vunpack.c.l.b16 %v57
    %v94 = vunpack.c.l.b16 %v58
    %v95 = vunpack.c.l.b16 %v59
    %v96 = vunpack.c.l.b16 %v60
    %v97 = vunpack.c.l.b16 %v61
    %v98 = vunpack.c.l.b16 %v62
    %v99 = vunpack.c.l.b16 %v63
    %v100 = vunpack.c.l.b16 %v64
    %v101 = vunpack.c.l.b16 %v65
    %v102 = vunpack.c.l.b16 %v66
    %v103 = vunpack.c.l.b16 %v67
    %v104 = vunpack.c.l.b16 %v68
    %v105 = vunpack.c.l.b16 %v69
    %v106 = vunpack.c.l.b16 %v70
    %v107 = vpack.c.b16 %v92, %v91
    %v108 = vpack.c.b16 %v94, %v93
    %v109 = vpack.c.b16 %v96, %v95
    %v110 = vpack.c.b16 %v98, %v97
    %v111 = vpack.c.b16 %v100, %v99
    %v112 = vpack.c.b16 %v102, %v101
    %v113 = vpack.c.b16 %v104, %v103
    %v114 = vpack.c.b16 %v106, %v105
    %123 = vmatpush.bf16.msra.mxu0 %v114
    %124 = vmatpush.bf16.msra.mxu0 %v113
    %125 = vmatpush.bf16.msra.mxu0 %v112
    %126 = vmatpush.bf16.msra.mxu0 %v111
    %127 = vmatpush.bf16.msra.mxu0 %v110
    %128 = vmatpush.bf16.msra.mxu0 %v109
    %129 = vmatpush.bf16.msra.mxu0 %v108
    %130 = vmatpush.bf16.msra.mxu0 %v107
    %131 = vmatmul.bf16.gmra.mxu0 %v54
    %v132 = vpop.f32.mrf.mxu0
    %v133 = vadd.f32 %v73, %v132
    %v134 = vpop.f32.mrf.mxu0
    %135 = vdwg.mxu0
    %v136 = vtanh.pop %v133
    %v137 = vld [vmem:[%s3] sm:$0x1]
    %v138 = vunpack.c.l.bf16 %v137
    %v139 = vperm.slane %v138, 0
    %v140 = vmul.f32 %v136, %v139
    %vm141 = vcmask 1041408
    %v142 = vsel %vm141, %v140, 0.0
    %143 = vadd.xlane.f32.xlu0 %v142
    %v144 = vpop.xlane.xlu0 %143
    %v145 = vld [vmem:[#allocation2] sm:$0x1]
    %147 = vset.pattern.permute.xlu0 0
    %148 = vperm.xlu0 %147, %v145
    %v149 = vpop.permute.xlu0 %148
    %v151 = vperm.slane %v149, 0
    %v152 = vadd.f32 %v144, %v151
    %v153 = vsub.f32 0.0, %v152
    %v154 = vmul.f32 %v153, 1.442695
    %v155 = vpow.pop %v154
    %v156 = vadd.f32 %v155, 1.0
    %v157 = vrcp.pop %v156
    %v158 = vmul.f32 %v156, %v157
    %v159 = vsub.f32 1.0, %v158
    %v160 = vmul.f32 %v157, %v159
    %v161 = vadd.f32 %v157, %v160
    %vm162 = vweird.f32 %v156
    %vm163 = vweird.f32 %v157
    %vm164 = vmor %vm162, %vm163
    %v165 = vsel %vm164, %v157, %v161
    %v166 = vand.u32 2147483647, %v156
    %vm167 = vcmp.eq.f32.partialorder %v166, 8.507059e+37
    %v168 = vand.u32 %v156, 2147483648
    %v169 = vor.u32 1.1754944e-38, %v168
    %v170 = vsel %vm167, %v169, %v165
    %v171 = vmul.f32 1.0, %v170
    %v173 = vlaneseq
    %v174 = vand.u32 %v173, 127
    %v175 = vperm.slane %v171, %v174
    %vm177 = vcmask 8192
    %178 = vst.msk [vmem:[#allocation8] sm:$0x1] %vm177, %v175
    // Predicated region
    $region30: #{tpu_custom_call.1} parent=1 // pred_check
      _
    $region31: #{tpu_custom_call.1} parent=1 // pred_check_branch
      %180 = sbr.rel (0) target = $region33
    $region32: #{tpu_custom_call.1} parent=1 // pred_region
      %182 = vsyncadd [#allocation5], 0
      %s184 = sshll.u32 [#allocation8], 4
      %s185 = int_to_ptr.vmem [resolvable:$true] %s184
      %s186 = sshll.u32 %s5, 4
      %s187 = int_to_ptr.hbm [resolvable:$true] %s186
      %189 = dma.vmem_to_hbm [thread:$0]  %s185, 16, %s187, [#allocation5]
    $region33: #{tpu_custom_call.1} parent=1 // pred_fallthru
      _
    // Predicated region
    $region34: #{tpu_custom_call.1} parent=1 // pred_check
      _
    $region35: #{tpu_custom_call.1} parent=1 // pred_check_branch
      %191 = sbr.rel (0) target = $region37
    $region36: #{tpu_custom_call.1} parent=1 // pred_region
      %193 = dma.done [#allocation5], 16
    $region37: #{tpu_custom_call.1} parent=1 // pred_fallthru
      _
    %194 = vsyncpa [#allocation4], 1
    %195 = vsyncpa [#allocation7], 1
    %196 = vsyncpa [#allocation5], 1

</llo_original>
